<compile_context>
chip_gen: v6e
topology: v6e:2x2x1
jax: 0.10.0
libtpu: 0.0.40
codegen_flags: <defaults>
</compile_context>

<pallas_src>
import jax
import jax.numpy as jnp
from jax.experimental import pallas as pl
from jax.experimental.pallas import tpu as pltpu


def _cdiv(a: int, b: int) -> int:
    return -(-a // b)


def _round_up(x: int, mult: int) -> int:
    return ((x + mult - 1) // mult) * mult


def _vmem_capacity_bytes() -> int:
    """Per-TensorCore VMEM capacity; conservative (v7x-sized) fallback."""
    try:
        info = pltpu.get_tpu_info()
        cap = getattr(info, "vmem_capacity_bytes", None)
        if cap:
            return int(cap)
    except Exception:
        pass
    return 64 * 1024 * 1024


def _vmem_bytes(tm: int, tn: int, r: int) -> int:
    """Footprint as Mosaic actually allocates it: every BlockSpec operand is
    double-buffered (even W with a constant block index along i), and the
    last two dims are padded to the (8, 128) layout tile."""
    r_lanes = _round_up(max(r, 1), 128)   # A's contraction dim sits on lanes
    r_subl = _round_up(max(r, 1), 8)      # W's contraction dim sits on sublanes
    tm_pad = _round_up(tm, 8)
    tn_pad = _round_up(tn, 128)
    a_bytes = 2 * tm_pad * r_lanes * 4
    w_bytes = 2 * r_subl * tn_pad * 4
    o_bytes = 2 * tm_pad * tn_pad * 4
    return a_bytes + w_bytes + o_bytes


def _nmf_kernel(a_ref, w_ref, o_ref):
    # (tm, r) @ (r, tn) on the MXU with f32 accumulation; output is f32 already.
    o_ref[...] = jnp.dot(a_ref[...], w_ref[...], preferred_element_type=jnp.float32)


def nmf_forward(A: jax.Array, W: jax.Array, *, tm: int | None = None,
                tn: int | None = None, vmem_limit_bytes: int | None = None):
    """Compute the NMF reconstruction A @ W with a Pallas TPU kernel."""
    m, r = A.shape
    r2, n = W.shape
    assert r == r2, "inner dims must match"

    A = A.astype(jnp.float32)
    W = W.astype(jnp.float32)

    # ---- generation-aware VMEM budget ---------------------------------------
    vmem_cap = _vmem_capacity_bytes()
    budget = int(vmem_cap * 0.70)          # ~90 MiB on v5e/v6e, ~45 MiB on v7x

    # ---- tile selection (cdiv grid: tiles need not divide the dims) ---------
    if tn is None:
        tn = n if n <= 8192 else 8192
    if tm is None:
        tm = m if m <= 1024 else 1024
    # Legalize: last-2 block dims must be multiples of (8, 128) or full extent.
    if tn != n:
        tn = max(128, (tn // 128) * 128)
    if tm != m:
        tm = max(8, (tm // 8) * 8)

    # ---- VMEM back-off: shrink tm first (keep the lane/write-burst dim wide).
    while _vmem_bytes(tm, tn, r) > budget and tm > 8:
        tm = max(8, _round_up(tm // 2, 8))
    while _vmem_bytes(tm, tn, r) > budget and tn > 128:
        tn = max(128, _round_up(tn // 2, 128))

    # ---- make sure a parallel axis has >= 2 steps (v7x has 2 TensorCores) ---
    grid_i = _cdiv(m, tm)
    grid_j = _cdiv(n, tn)
    if grid_i * grid_j == 1:
        if m >= 16:
            tm = max(8, _round_up(_cdiv(m, 2), 8))
            grid_i = _cdiv(m, tm)
        elif n >= 256:
            tn = max(128, _round_up(_cdiv(n, 2), 128))
            grid_j = _cdiv(n, tn)
    grid = (grid_i, grid_j)

    if vmem_limit_bytes is None:
        # A limit (not an allocation): anything comfortably under physical VMEM.
        vmem_limit_bytes = int(vmem_cap * 0.85)

    return pl.pallas_call(
        _nmf_kernel,
        out_shape=jax.ShapeDtypeStruct((m, n), jnp.float32),
        grid_spec=pltpu.PrefetchScalarGridSpec(
            num_scalar_prefetch=0,
            grid=grid,
            in_specs=[
                # A tile: (tm, r) — full (tiny) contraction dim; re-fetched only
                # when the row-block index i changes (j is the fast axis).
                pl.BlockSpec((tm, r), lambda i, j: (i, 0)),
                # W block: (r, tn) — pipelined DMA per column block, no in-kernel
                # dynamic slice (lower vreg pressure).
                pl.BlockSpec((r, tn), lambda i, j: (0, j)),
            ],
            out_specs=pl.BlockSpec((tm, tn), lambda i, j: (i, j)),
        ),
        compiler_params=pltpu.CompilerParams(
            dimension_semantics=("parallel", "parallel"),
            vmem_limit_bytes=vmem_limit_bytes,
        ),
        cost_estimate=pl.CostEstimate(
            flops=2 * m * n * r,
            bytes_accessed=4 * (m * r + r * n + m * n),
            transcendentals=0,
        ),
    )(A, W)


if __name__ == "__main__":
    # Module-consistent small shapes: m = 256 rows of the data matrix, r = 22
    # latent rank (as in the source file).
    m, r = 256, 22

    key = jax.random.PRNGKey(0)
    kA, kW = jax.random.split(key)
    # torch.rand -> uniform [0, 1), float32
    A = jax.random.uniform(kA, (m, r), dtype=jnp.float32)
    W = jax.random.uniform(kW, (r, m), dtype=jnp.float32)

    out = jax.block_until_ready(nmf_forward(A, W))

    # Correctness check against the plain JAX reference.
    ref = A @ W
    assert out.shape == (m, m)
    assert jnp.allclose(out, ref, atol=1e-4, rtol=1e-4)

    print("KERNEL_OK")
</pallas_src>

<mosaic_0001>
module attributes {stable_mosaic.version = 11 : i64} {
  func.func @_nmf_kernel(%arg0: i32, %arg1: i32, %arg2: memref<128x22xf32, #tpu.memory_space<vmem>>, %arg3: memref<22x256xf32, #tpu.memory_space<vmem>>, %arg4: memref<128x256xf32, #tpu.memory_space<vmem>>) attributes {dimension_semantics = [#tpu.dimension_semantics<parallel>, #tpu.dimension_semantics<parallel>], iteration_bounds = array<i64: 2, 1>, scalar_prefetch = 0 : i64, scratch_operands = 0 : i64, tpu.core_type = #tpu.core_type<tc>, window_params = [{transform_indices = @transform_0, window_bounds = array<i64: 128, 22>}, {transform_indices = @transform_1, window_bounds = array<i64: 22, 256>}, {transform_indices = @transform_2, window_bounds = array<i64: 128, 256>}]} {
    %c0 = arith.constant 0 : index
    %c0_0 = arith.constant 0 : index
    %0 = vector.load %arg2[%c0, %c0_0] : memref<128x22xf32, #tpu.memory_space<vmem>>, vector<128x22xf32>
    %c0_1 = arith.constant 0 : index
    %c0_2 = arith.constant 0 : index
    %1 = vector.load %arg3[%c0_1, %c0_2] : memref<22x256xf32, #tpu.memory_space<vmem>>, vector<22x256xf32>
    %cst = arith.constant dense<0.000000e+00> : vector<128x256xf32>
    %2 = tpu.matmul %0, %1, %cst {dimension_numbers = #tpu.dot_dimension_numbers<[1], [0], [0], [1], [0, 0, 1, 1], [], []>} : vector<128x22xf32>, vector<22x256xf32>, vector<128x256xf32> -> vector<128x256xf32>
    %c0_3 = arith.constant 0 : index
    %c0_4 = arith.constant 0 : index
    %3 = vector.load %arg4[%c0_3, %c0_4] : memref<128x256xf32, #tpu.memory_space<vmem>>, vector<128x256xf32>
    tpu.vector_store %arg4[%c0_3, %c0_4], %2 {strides = array<i32>} : memref<128x256xf32, #tpu.memory_space<vmem>>, vector<128x256xf32>,
    return
  }
  func.func @transform_0(%arg0: i32, %arg1: i32) -> (i32, i32) {
    %c0_i32 = arith.constant 0 : i32
    %c0_i32_0 = arith.constant 0 : i32
    return %arg0, %c0_i32 : i32, i32
  }
  func.func @transform_1(%arg0: i32, %arg1: i32) -> (i32, i32) {
    %c0_i32 = arith.constant 0 : i32
    %c0_i32_0 = arith.constant 0 : i32
    return %c0_i32, %arg1 : i32, i32
  }
  func.func @transform_2(%arg0: i32, %arg1: i32) -> (i32, i32) {
    %c0_i32 = arith.constant 0 : i32
    return %arg0, %arg1 : i32, i32
  }
}

</mosaic_0001>

<llo_original>
// kernel: tpu_custom_call.1
$region0: #{tpu_custom_call.1}
  #allocation0 [shape = 'u32[]', space=smem, size = 0x4, offset = 0x4, fixed_abs, tag = 'smem constant byte address 0x4 - core index']
  #allocation1 [shape = 'u32[144,128]{1,0:T(1,128)}', space=vmem, size = 0x12000, scoped, tag = 'internal scratch']
  %s0 = inlined_call_operand.vmem [shape: f32[256,22], index: 0, kind: input, shape index: {}]
  %s1 = inlined_call_operand.vmem [shape: f32[22,256], index: 1, kind: input, shape index: {}]
  %s2 = inlined_call_operand.hbm [shape: f32[256,256], index: 2, kind: output, shape index: {}]
  %s3 = sld [smem:[#allocation0]]
  $region41: #{tpu_custom_call.1} parent=0
    _
  %s5 = ssub.s32 1, %s3
  %s6 = scalar_select 0, %s5, %s3
  $region1: #{tpu_custom_call.1} parent=0
    #allocation2 [shape = 'u8[262144]{0}', space=vmem, size = 0x40000, scoped, tag = 'output window, operand 0']
    #allocation3 [shape = 's32[2]{0}', space=sflag, size = 0x8, scoped, tag = 'scoped memory for tpu_custom_call.1']
    %7 = vsyncpa [#allocation3], 0
    %s8 = scalar_lea.sflag [#allocation3], 1
    %9 = vsyncpa %s8, 0
    loop: start=0, step=1, limit=4
    $region2: #{tpu_custom_call.1} parent=1 // loop_pre_header
      _
    $region3: #{tpu_custom_call.1} parent=1 // loop_header
      %s11 = sphi 0, %s15
      %p12 = scmp.ge.s32.totalorder %s11, 4
      %s18 = sphi 0, %s30
      %s19 = sphi 0, %s26
      %s20 = sphi 0, %s18
      %s21 = sphi 0, %s19
      %s22 = sphi 0, %s20
      %s23 = sphi 0, %s21
      %s33 = sphi 0, %s35
      %s36 = sphi 0, %s33
      %s37 = sphi 0, %s36
      %s53 = sphi 0, %s37
      %s59 = sphi 0, %s61
      %s62 = sphi 0, %s59
      %s63 = sphi 0, %s62
      %s79 = sphi 0, %s63
      %s87 = sphi 0, %s89
      %s90 = sphi 0, %s87
      %s91 = sphi 0, %s90
      %s107 = sphi 0, %s91
    $region4: #{tpu_custom_call.1} parent=1 // loop_header_branch
      %14 = sbr.rel (%p12) target = $region8
    $region5: #{tpu_custom_call.1} parent=1 // loop_body
      %s16 = ssub.s32 %s11, 1
      %s17 = ssub.s32 %s11, 2
      %s24 = sadd.s32 1, %s19
      %p25 = scmp.ge.s32.totalorder %s24, 1
      %s26 = scalar_select %p25, 0, %s24
      %s27 = sadd.s32 1, %s18
      %s28 = scalar_select %p25, %s27, %s18
      %p29 = scmp.ge.s32.totalorder %s28, 2
      %s30 = scalar_select %p29, 0, %s28
      %s31 = ssub.s32 %s18, %s30
      %p32 = scmp.eq.s32.totalorder %s31, 0
      %s34 = sadd.s32 %s33, 1
      %s35 = scalar_select %p32, %s33, %s34
      %p38 = pneg %p32
      %p39 = scmp.eq.s32.totalorder %s11, 1
      %p40 = por %p38, %p39
      %p41 = scmp.ne.s32.totalorder %s33, %s36
      %p42 = scmp.eq.s32.totalorder %s11, 0
      %p43 = por %p41, %p42
      %p44 = scmp.ne.s32.totalorder %s33, %s36
      %p45 = scmp.eq.s32.totalorder %s16, 1
      %p46 = por %p44, %p45
      %p47 = scmp.ne.s32.totalorder %s36, %s37
      %p48 = scmp.eq.s32.totalorder %s16, 0
      %p49 = por %p47, %p48
      %p50 = scmp.ne.s32.totalorder %s36, %s37
      %p51 = scmp.eq.s32.totalorder %s17, 1
      %p52 = por %p50, %p51
      %p54 = scmp.ne.s32.totalorder %s37, %s53
      %p55 = scmp.eq.s32.totalorder %s17, 0
      %p56 = por %p54, %p55
      %s57 = ssub.s32 %s19, %s26
      %p58 = scmp.eq.s32.totalorder %s57, 0
      %s60 = sadd.s32 %s59, 1
      %s61 = scalar_select %p58, %s59, %s60
      %p64 = pneg %p58
      %p65 = scmp.eq.s32.totalorder %s11, 1
      %p66 = por %p64, %p65
      %p67 = scmp.ne.s32.totalorder %s59, %s62
      %p68 = scmp.eq.s32.totalorder %s11, 0
      %p69 = por %p67, %p68
      %p70 = scmp.ne.s32.totalorder %s59, %s62
      %p71 = scmp.eq.s32.totalorder %s16, 1
      %p72 = por %p70, %p71
      %p73 = scmp.ne.s32.totalorder %s62, %s63
      %p74 = scmp.eq.s32.totalorder %s16, 0
      %p75 = por %p73, %p74
      %p76 = scmp.ne.s32.totalorder %s62, %s63
      %p77 = scmp.eq.s32.totalorder %s17, 1
      %p78 = por %p76, %p77
      %p80 = scmp.ne.s32.totalorder %s63, %s79
      %p81 = scmp.eq.s32.totalorder %s17, 0
      %p82 = por %p80, %p81
      %s83 = ssub.s32 %s18, %s30
      %s84 = ssub.s32 %s19, %s26
      %s85 = sor.u32 %s83, %s84
      %p86 = scmp.eq.s32.totalorder %s85, 0
      %s88 = sadd.s32 %s87, 1
      %s89 = scalar_select %p86, %s87, %s88
      %p92 = pneg %p86
      %p93 = scmp.eq.s32.totalorder %s11, 1
      %p94 = por %p92, %p93
      %p95 = scmp.ne.s32.totalorder %s87, %s90
      %p96 = scmp.eq.s32.totalorder %s11, 0
      %p97 = por %p95, %p96
      %p98 = scmp.ne.s32.totalorder %s87, %s90
      %p99 = scmp.eq.s32.totalorder %s16, 1
      %p100 = por %p98, %p99
      %p101 = scmp.ne.s32.totalorder %s90, %s91
      %p102 = scmp.eq.s32.totalorder %s16, 0
      %p103 = por %p101, %p102
      %p104 = scmp.ne.s32.totalorder %s90, %s91
      %p105 = scmp.eq.s32.totalorder %s17, 1
      %p106 = por %p104, %p105
      %p108 = scmp.ne.s32.totalorder %s91, %s107
      %p109 = scmp.eq.s32.totalorder %s17, 0
      %p110 = por %p108, %p109
      %p111 = scmp.le.s32.totalorder 1, %s11
      %p112 = scmp.lt.s32.totalorder %s11, 3
      %p113 = pnand %p111, %p112
      %p114 = pneg %p113
      // Predicated region
      $region9: #{tpu_custom_call.1} parent=5 // pred_check
        _
      $region10: #{tpu_custom_call.1} parent=5 // pred_check_branch
        %116 = sbr.rel (%p113) target = $region12
      $region11: #{tpu_custom_call.1} parent=5 // pred_region
        %s117 = ssub.s32 %s11, 1
        // Predicated region
        $region13: #{tpu_custom_call.1} parent=11 // pred_check
          %p118 = pneg %p75
        $region14: #{tpu_custom_call.1} parent=11 // pred_check_branch
          %120 = sbr.rel (%p118) target = $region16
        $region15: #{tpu_custom_call.1} parent=11 // pred_region
          %s121 = smul.u32 2, %s21
          %p122 = scmp.lt.s32.totalorder %s121, 1
          %s123 = scalar_select %p122, %s121, 1
          %s124 = smul.addr %s123, 8
          %s125 = scalar_lea.vmem %s1, %s124
          %s126 = smul.u32 2, %s21
        $region16: #{tpu_custom_call.1} parent=11 // pred_fallthru
          _
      $region12: #{tpu_custom_call.1} parent=5 // pred_fallthru
        _
      %p127 = scmp.lt.s32.totalorder %s11, 2
      // Predicated region
      $region17: #{tpu_custom_call.1} parent=5 // pred_check
        %p128 = pneg %p127
      $region18: #{tpu_custom_call.1} parent=5 // pred_check_branch
        %130 = sbr.rel (%p128) target = $region20
      $region19: #{tpu_custom_call.1} parent=5 // pred_region
        // Predicated region
        $region21: #{tpu_custom_call.1} parent=19 // pred_check
          %p131 = pneg %p43
        $region22: #{tpu_custom_call.1} parent=19 // pred_check_branch
          %133 = sbr.rel (%p131) target = $region24
        $region23: #{tpu_custom_call.1} parent=19 // pred_region
          %s134 = smul.u32 16, %s18
          %p135 = scmp.lt.s32.totalorder %s134, 31
          %s136 = scalar_select %p135, %s134, 31
          %s137 = smul.addr %s136, 8
          %s138 = scalar_lea.vmem %s0, %s137
          %s139 = smul.u32 16, %s18
        $region24: #{tpu_custom_call.1} parent=19 // pred_fallthru
          _
      $region20: #{tpu_custom_call.1} parent=5 // pred_fallthru
        _
      %p140 = scmp.le.s32.totalorder 1, %s11
      %p141 = scmp.lt.s32.totalorder %s11, 3
      %p142 = pnand %p140, %p141
      %p143 = pneg %p142
      // Predicated region
      $region25: #{tpu_custom_call.1} parent=5 // pred_check
        _
      $region26: #{tpu_custom_call.1} parent=5 // pred_check_branch
        %145 = sbr.rel (%p142) target = $region28
      $region27: #{tpu_custom_call.1} parent=5 // pred_region
        %s146 = ssub.s32 %s11, 1
        %s147 = smul.u32 16, %s20
        %p148 = scmp.lt.s32.totalorder %s147, 31
        %s149 = scalar_select %p148, %s147, 31
        %s150 = smul.addr %s149, 8
        %s151 = scalar_lea.vmem %s0, %s150
        %p152 = pneg %p49
        %p153 = pneg %p46
        %s154 = smul.u32 2, %s21
        %p155 = scmp.lt.s32.totalorder %s154, 1
        %s156 = scalar_select %p155, %s154, 1
        %s157 = smul.addr %s156, 8
        %s158 = scalar_lea.vmem %s1, %s157
        %p159 = pneg %p75
        %p160 = pneg %p72
        %p161 = pneg %p103
        %p162 = pneg %p100
        %s163 = sand.u32 %s90, 1
        %s164 = scalar_lea.sflag [#allocation3], %s163
        %s165 = sand.u32 %s90, 1
        %s166 = smul.addr %s165, 256
        %s167 = scalar_lea.vmem [#allocation2], %s166
        %s168 = smul.u32 16, %s20
        %p169 = scmp.lt.s32.totalorder %s168, 31
        %s170 = scalar_select %p169, %s168, 31
        %s171 = smul.addr %s170, 8
        %s172 = scalar_lea.vmem %s0, %s171
        %s173 = smul.u32 16, %s20
        %s174 = smul.u32 2, %s21
        %p175 = scmp.lt.s32.totalorder %s174, 1
        %s176 = scalar_select %p175, %s174, 1
        %s177 = smul.addr %s176, 8
        %s178 = scalar_lea.vmem %s1, %s177
        %s179 = smul.u32 2, %s21
        %s180 = smul.u32 16, %s20
        %s181 = smul.u32 2, %s21
        %v182 = vld [vmem:[%s172] sm:$0xff]
        %v183 = vld [vmem:[%s172 + $0x8] sm:$0xff]
        %v184 = vld [vmem:[%s172 + $0x10] sm:$0xff]
        %v185 = vld [vmem:[%s172 + $0x18] sm:$0xff]
        %v186 = vld [vmem:[%s172 + $0x20] sm:$0xff]
        %v187 = vld [vmem:[%s172 + $0x28] sm:$0xff]
        %v188 = vld [vmem:[%s172 + $0x30] sm:$0xff]
        %v189 = vld [vmem:[%s172 + $0x38] sm:$0xff]
        %v190 = vld [vmem:[%s172 + $0x40] sm:$0xff]
        %v191 = vld [vmem:[%s172 + $0x48] sm:$0xff]
        %v192 = vld [vmem:[%s172 + $0x50] sm:$0xff]
        %v193 = vld [vmem:[%s172 + $0x58] sm:$0xff]
        %v194 = vld [vmem:[%s172 + $0x60] sm:$0xff]
        %v195 = vld [vmem:[%s172 + $0x68] sm:$0xff]
        %v196 = vld [vmem:[%s172 + $0x70] sm:$0xff]
        %v197 = vld [vmem:[%s172 + $0x78] sm:$0xff]
        %v198 = vld [vmem:[%s178] sm:$0xff]
        %v199 = vld [vmem:[%s178 + $0x8] sm:$0xff]
        %v200 = vld [vmem:[%s178 + $0x10] sm:$0xff]
        %v201 = vld [vmem:[%s178 + $0x18] sm:$0xff]
        %v202 = vld [vmem:[%s178 + $0x20] sm:$0x3f]
        %v203 = vld [vmem:[%s178 + $0x28] sm:$0x3f]
        %vm204 = vcmask 179200
        %v206 = vsel %vm204, %v182, 0
        %v209 = vsel %vm204, %v183, 0
        %v212 = vsel %vm204, %v184, 0
        %v215 = vsel %vm204, %v185, 0
        %v218 = vsel %vm204, %v186, 0
        %v221 = vsel %vm204, %v187, 0
        %v224 = vsel %vm204, %v188, 0
        %v227 = vsel %vm204, %v189, 0
        %v230 = vsel %vm204, %v190, 0
        %v233 = vsel %vm204, %v191, 0
        %v236 = vsel %vm204, %v192, 0
        %v239 = vsel %vm204, %v193, 0
        %v242 = vsel %vm204, %v194, 0
        %v245 = vsel %vm204, %v195, 0
        %v248 = vsel %vm204, %v196, 0
        %v251 = vsel %vm204, %v197, 0
        %vm253 = vcmask 1045504
        %v255 = vsel %vm253, %v202, 0
        %v258 = vsel %vm253, %v203, 0
        %260 = vmatprep.subr.mxu0 0.0
        %261 = vmatpush1.msra.mxu0 0.0
        %262 = vmatprep.subr.mxu0 0.0
        %263 = vmatpush1.msra.mxu0 0.0
        %264 = vmatprep.subr.mxu0 0.0
        %265 = vmatpush1.msra.mxu0 0.0
        %266 = vmatprep.subr.mxu0 0.0
        %267 = vmatpush1.msra.mxu0 0.0
        %268 = vmatprep.subr.mxu0 0.0
        %269 = vmatpush1.msra.mxu0 0.0
        %270 = vmatprep.subr.mxu0 0.0
        %271 = vmatpush1.msra.mxu0 0.0
        %272 = vmatprep.subr.mxu0 0.0
        %273 = vmatpush1.msra.mxu0 0.0
        %274 = vmatprep.subr.mxu0 0.0
        %275 = vmatpush1.msra.mxu0 0.0
        %276 = vmatprep.subr.mxu0 0.0
        %277 = vmatpush1.msra.mxu0 0.0
        %278 = vmatprep.subr.mxu0 0.0
        %279 = vmatpush1.msra.mxu0 0.0
        %280 = vmatprep.subr.mxu0 0.0
        %281 = vmatpush1.msra.mxu0 0.0
        %282 = vmatprep.subr.mxu0 0.0
        %283 = vmatpush1.msra.mxu0 0.0
        %284 = vmatprep.subr.mxu0 0.0
        %285 = vmatpush1.msra.mxu0 0.0
        %286 = vmatprep.subr.mxu0 %v258
        %287 = vmatpush1.msra.mxu0 %v255
        %288 = vmatprep.subr.mxu0 %v201
        %289 = vmatpush1.msra.mxu0 %v200
        %290 = vmatprep.subr.mxu0 %v199
        %291 = vmatpush1.msra.mxu0 %v198
        %292 = vmatprep.subr.mxu0 0.0
        %293 = vmatpush2.msra.mxu0 0.0
        %294 = vmatprep.subr.mxu0 0.0
        %295 = vmatpush2.msra.mxu0 0.0
        %296 = vmatprep.subr.mxu0 0.0
        %297 = vmatpush2.msra.mxu0 0.0
        %298 = vmatprep.subr.mxu0 0.0
        %299 = vmatpush2.msra.mxu0 0.0
        %300 = vmatprep.subr.mxu0 0.0
        %301 = vmatpush2.msra.mxu0 0.0
        %302 = vmatprep.subr.mxu0 0.0
        %303 = vmatpush2.msra.mxu0 0.0
        %304 = vmatprep.subr.mxu0 0.0
        %305 = vmatpush2.msra.mxu0 0.0
        %306 = vmatprep.subr.mxu0 0.0
        %307 = vmatpush2.msra.mxu0 0.0
        %308 = vmatprep.subr.mxu0 0.0
        %309 = vmatpush2.msra.mxu0 0.0
        %310 = vmatprep.subr.mxu0 0.0
        %311 = vmatpush2.msra.mxu0 0.0
        %312 = vmatprep.subr.mxu0 0.0
        %313 = vmatpush2.msra.mxu0 0.0
        %314 = vmatprep.subr.mxu0 0.0
        %315 = vmatpush2.msra.mxu0 0.0
        %316 = vmatprep.subr.mxu0 0.0
        %317 = vmatpush2.msra.mxu0 0.0
        %318 = vmatprep.subr.mxu0 0.0
        %319 = vmatpush2.msra.mxu0 0.0
        %320 = vmatprep.subr.mxu0 0.0
        %321 = vmatpush2.msra.mxu0 0.0
        %322 = vmatprep.subr.mxu0 0.0
        %323 = vmatpush2.msra.mxu0 0.0
        %324 = vmatprep.mubr.f32.mxu0 0.0
        %325 = vmatmul.mubr.f32.gmra.mxu0 %v206
        %v326 = vpop.f32.mrf.mxu0
        %v327 = vadd.f32 0.0, %v326
        %v328 = vpop.f32.mrf.mxu0
        %v329 = vadd.f32 0.0, %v328
        %330 = vmatprep.mubr.f32.mxu0 0.0
        %331 = vmatmul.mubr.f32.gmra.mxu0 %v209
        %v332 = vpop.f32.mrf.mxu0
        %v333 = vadd.f32 0.0, %v332
        %v334 = vpop.f32.mrf.mxu0
        %v335 = vadd.f32 0.0, %v334
        %336 = vmatprep.mubr.f32.mxu0 0.0
        %337 = vmatmul.mubr.f32.gmra.mxu0 %v212
        %v338 = vpop.f32.mrf.mxu0
        %v339 = vadd.f32 0.0, %v338
        %v340 = vpop.f32.mrf.mxu0
        %v341 = vadd.f32 0.0, %v340
        %342 = vmatprep.mubr.f32.mxu0 0.0
        %343 = vmatmul.mubr.f32.gmra.mxu0 %v215
        %v344 = vpop.f32.mrf.mxu0
        %v345 = vadd.f32 0.0, %v344
        %v346 = vpop.f32.mrf.mxu0
        %v347 = vadd.f32 0.0, %v346
        %348 = vmatprep.mubr.f32.mxu0 0.0
        %349 = vmatmul.mubr.f32.gmra.mxu0 %v218
        %v350 = vpop.f32.mrf.mxu0
        %v351 = vadd.f32 0.0, %v350
        %v352 = vpop.f32.mrf.mxu0
        %v353 = vadd.f32 0.0, %v352
        %354 = vmatprep.mubr.f32.mxu0 0.0
        %355 = vmatmul.mubr.f32.gmra.mxu0 %v221
        %v356 = vpop.f32.mrf.mxu0
        %v357 = vadd.f32 0.0, %v356
        %v358 = vpop.f32.mrf.mxu0
        %v359 = vadd.f32 0.0, %v358
        %360 = vmatprep.mubr.f32.mxu0 0.0
        %361 = vmatmul.mubr.f32.gmra.mxu0 %v224
        %v362 = vpop.f32.mrf.mxu0
        %v363 = vadd.f32 0.0, %v362
        %v364 = vpop.f32.mrf.mxu0
        %v365 = vadd.f32 0.0, %v364
        %366 = vmatprep.mubr.f32.mxu0 0.0
        %367 = vmatmul.mubr.f32.gmra.mxu0 %v227
        %v368 = vpop.f32.mrf.mxu0
        %v369 = vadd.f32 0.0, %v368
        %v370 = vpop.f32.mrf.mxu0
        %v371 = vadd.f32 0.0, %v370
        %372 = vmatprep.mubr.f32.mxu0 0.0
        %373 = vmatmul.mubr.f32.gmra.mxu0 %v230
        %v374 = vpop.f32.mrf.mxu0
        %v375 = vadd.f32 0.0, %v374
        %v376 = vpop.f32.mrf.mxu0
        %v377 = vadd.f32 0.0, %v376
        %378 = vmatprep.mubr.f32.mxu0 0.0
        %379 = vmatmul.mubr.f32.gmra.mxu0 %v233
        %v380 = vpop.f32.mrf.mxu0
        %v381 = vadd.f32 0.0, %v380
        %v382 = vpop.f32.mrf.mxu0
        %v383 = vadd.f32 0.0, %v382
        %384 = vmatprep.mubr.f32.mxu0 0.0
        %385 = vmatmul.mubr.f32.gmra.mxu0 %v236
        %v386 = vpop.f32.mrf.mxu0
        %v387 = vadd.f32 0.0, %v386
        %v388 = vpop.f32.mrf.mxu0
        %v389 = vadd.f32 0.0, %v388
        %390 = vmatprep.mubr.f32.mxu0 0.0
        %391 = vmatmul.mubr.f32.gmra.mxu0 %v239
        %v392 = vpop.f32.mrf.mxu0
        %v393 = vadd.f32 0.0, %v392
        %v394 = vpop.f32.mrf.mxu0
        %v395 = vadd.f32 0.0, %v394
        %396 = vmatprep.mubr.f32.mxu0 0.0
        %397 = vmatmul.mubr.f32.gmra.mxu0 %v242
        %v398 = vpop.f32.mrf.mxu0
        %v399 = vadd.f32 0.0, %v398
        %v400 = vpop.f32.mrf.mxu0
        %v401 = vadd.f32 0.0, %v400
        %402 = vmatprep.mubr.f32.mxu0 0.0
        %403 = vmatmul.mubr.f32.gmra.mxu0 %v245
        %v404 = vpop.f32.mrf.mxu0
        %v405 = vadd.f32 0.0, %v404
        %v406 = vpop.f32.mrf.mxu0
        %v407 = vadd.f32 0.0, %v406
        %408 = vmatprep.mubr.f32.mxu0 0.0
        %409 = vmatmul.mubr.f32.gmra.mxu0 %v248
        %v410 = vpop.f32.mrf.mxu0
        %v411 = vadd.f32 0.0, %v410
        %v412 = vpop.f32.mrf.mxu0
        %v413 = vadd.f32 0.0, %v412
        %414 = vmatprep.mubr.f32.mxu0 0.0
        %415 = vmatmul.mubr.f32.gmra.mxu0 %v251
        %v416 = vpop.f32.mrf.mxu0
        %v417 = vadd.f32 0.0, %v416
        %v418 = vpop.f32.mrf.mxu0
        %v419 = vadd.f32 0.0, %v418
        %420 = vdwg.mxu0
        %421 = vst [vmem:[%s167] sm:$0xff] %v327
        %422 = vst [vmem:[%s167 + $0x8] sm:$0xff] %v329
        %423 = vst [vmem:[%s167 + $0x10] sm:$0xff] %v333
        %424 = vst [vmem:[%s167 + $0x18] sm:$0xff] %v335
        %425 = vst [vmem:[%s167 + $0x20] sm:$0xff] %v339
        %426 = vst [vmem:[%s167 + $0x28] sm:$0xff] %v341
        %427 = vst [vmem:[%s167 + $0x30] sm:$0xff] %v345
        %428 = vst [vmem:[%s167 + $0x38] sm:$0xff] %v347
        %429 = vst [vmem:[%s167 + $0x40] sm:$0xff] %v351
        %430 = vst [vmem:[%s167 + $0x48] sm:$0xff] %v353
        %431 = vst [vmem:[%s167 + $0x50] sm:$0xff] %v357
        %432 = vst [vmem:[%s167 + $0x58] sm:$0xff] %v359
        %433 = vst [vmem:[%s167 + $0x60] sm:$0xff] %v363
        %434 = vst [vmem:[%s167 + $0x68] sm:$0xff] %v365
        %435 = vst [vmem:[%s167 + $0x70] sm:$0xff] %v369
        %436 = vst [vmem:[%s167 + $0x78] sm:$0xff] %v371
        %437 = vst [vmem:[%s167 + $0x80] sm:$0xff] %v375
        %438 = vst [vmem:[%s167 + $0x88] sm:$0xff] %v377
        %439 = vst [vmem:[%s167 + $0x90] sm:$0xff] %v381
        %440 = vst [vmem:[%s167 + $0x98] sm:$0xff] %v383
        %441 = vst [vmem:[%s167 + $0xa0] sm:$0xff] %v387
        %442 = vst [vmem:[%s167 + $0xa8] sm:$0xff] %v389
        %443 = vst [vmem:[%s167 + $0xb0] sm:$0xff] %v393
        %444 = vst [vmem:[%s167 + $0xb8] sm:$0xff] %v395
        %445 = vst [vmem:[%s167 + $0xc0] sm:$0xff] %v399
        %446 = vst [vmem:[%s167 + $0xc8] sm:$0xff] %v401
        %447 = vst [vmem:[%s167 + $0xd0] sm:$0xff] %v405
        %448 = vst [vmem:[%s167 + $0xd8] sm:$0xff] %v407
        %449 = vst [vmem:[%s167 + $0xe0] sm:$0xff] %v411
        %450 = vst [vmem:[%s167 + $0xe8] sm:$0xff] %v413
        %451 = vst [vmem:[%s167 + $0xf0] sm:$0xff] %v417
        %452 = vst [vmem:[%s167 + $0xf8] sm:$0xff] %v419
        %s453 = sand.u32 %s90, 1
        %s454 = scalar_lea.sflag [#allocation3], %s453
        %s455 = sand.u32 %s90, 1
        %s456 = smul.addr %s455, 256
        %s457 = scalar_lea.vmem [#allocation2], %s456
        // Predicated region
        $region29: #{tpu_custom_call.1} parent=27 // pred_check
          %p458 = pneg %p100
        $region30: #{tpu_custom_call.1} parent=27 // pred_check_branch
          %460 = sbr.rel (%p458) target = $region32
        $region31: #{tpu_custom_call.1} parent=27 // pred_region
          %s461 = smul.u32 16, %s20
          %s462 = smul.u32 2, %s21
          %s464 = ssub.s32 4096, 4096
          %465 = vsyncadd %s454, %s464
          %s466 = smul.addr %s461, 2
          %s467 = sadd.s32 %s462, %s466
          %s468 = smul.addr %s467, 128
          %s469 = scalar_lea.hbm %s2, %s468
          %s470 = sshll.u32 %s457, 4
          %s471 = int_to_ptr.vmem [resolvable:$true] %s470
          %476 = dma.vmem_to_hbm [thread:$0]  %s471, 4096, %s469, %s454, 256, 256, 16
        $region32: #{tpu_custom_call.1} parent=27 // pred_fallthru
          _
      $region28: #{tpu_custom_call.1} parent=5 // pred_fallthru
        _
      %p477 = scmp.le.s32.totalorder 2, %s11
      // Predicated region
      $region33: #{tpu_custom_call.1} parent=5 // pred_check
        %p478 = pneg %p477
      $region34: #{tpu_custom_call.1} parent=5 // pred_check_branch
        %480 = sbr.rel (%p478) target = $region36
      $region35: #{tpu_custom_call.1} parent=5 // pred_region
        %s481 = ssub.s32 %s11, 2
        // Predicated region
        $region37: #{tpu_custom_call.1} parent=35 // pred_check
          %p482 = pneg %p106
        $region38: #{tpu_custom_call.1} parent=35 // pred_check_branch
          %484 = sbr.rel (%p482) target = $region40
        $region39: #{tpu_custom_call.1} parent=35 // pred_region
          %s485 = sand.u32 %s91, 1
          %s486 = scalar_lea.sflag [#allocation3], %s485
          %s487 = sand.u32 %s91, 1
          %s488 = smul.addr %s487, 256
          %s489 = scalar_lea.vmem [#allocation2], %s488
          %490 = dma.done %s486, 4096
        $region40: #{tpu_custom_call.1} parent=35 // pred_fallthru
          _
      $region36: #{tpu_custom_call.1} parent=5 // pred_fallthru
        _
    $region6: #{tpu_custom_call.1} parent=1 // loop_footer
      %s15 = sadd.s32 1, %s11
    $region7: #{tpu_custom_call.1} parent=1 // loop_footer_branch
      %10 = sbr.rel target = $region3
    $region8: #{tpu_custom_call.1} parent=1 // loop_exit
      _
    %491 = vsyncpa [#allocation3], 1
    %s492 = scalar_lea.sflag [#allocation3], 1
    %493 = vsyncpa %s492, 1

</llo_original>
